<compile_context>
chip_gen: v7x
topology: tpu7x:2x2x1
jax: 0.10.0
libtpu: 0.0.40
codegen_flags: <defaults>
</compile_context>

<pallas_src>
import functools
import math

import jax
import jax.numpy as jnp
from jax.experimental import pallas as pl
from jax.experimental.pallas import tpu as pltpu


_VMEM_BUDGET = 40 * 1024 * 1024  # scoped VMEM budget; leaves headroom on v7x (64 MiB/TC)


# ---------------------------------------------------------------------------
# Pallas kernel: per-tile matmul + bias.  Quantization hoisted to the wrapper,
# weight arrives pre-transposed (no per-tile VALU work, no .T).
# ---------------------------------------------------------------------------
def ttq_conv_kernel(patch_ref, w_ref, bias_ref, out_ref):
    acc = jnp.dot(patch_ref[...], w_ref[...], preferred_element_type=jnp.float32)
    out_ref[...] = acc + bias_ref[...]          # bias (1, tn) broadcasts


# ---------------------------------------------------------------------------
# Glue: im2col patch extraction (pure indexing, no compute).  Runs in bf16.
# ---------------------------------------------------------------------------
def _extract_patches(x, kh, kw, stride, padding, dilation):
    N, C, H, W = x.shape
    xp = jnp.pad(x, ((0, 0), (0, 0), (padding, padding), (padding, padding)))
    OH = (H + 2 * padding - dilation * (kh - 1) - 1) // stride + 1
    OW = (W + 2 * padding - dilation * (kw - 1) - 1) // stride + 1
    cols = []
    for i in range(kh):
        for j in range(kw):
            hi = i * dilation
            wi = j * dilation
            cols.append(
                xp[:, :, hi : hi + stride * OH : stride, wi : wi + stride * OW : stride]
            )  # (N, C, OH, OW)
    cols = jnp.stack(cols, axis=0).reshape(kh, kw, N, C, OH, OW)
    cols = jnp.transpose(cols, (2, 4, 5, 3, 0, 1))  # (N, OH, OW, C, KH, KW)
    return cols.reshape(N * OH * OW, C * kh * kw), OH, OW


def _round_up(v, m):
    return ((v + m - 1) // m) * m


# ---------------------------------------------------------------------------
# Wrapper: TTQConv2d.forward  (groups=1, bias=True)
# ---------------------------------------------------------------------------
def ttq_conv2d(x, weight, pos_scale, neg_scale, bias,
               stride=1, padding=0, dilation=1, tm_max=1024):
    N, C, H, W = x.shape
    OC, CG, KH, KW = weight.shape
    assert CG == C, "groups must be 1"

    # ---- im2col in bf16 (pure indexing; all intermediates 2-byte). ---------
    patches, OH, OW = _extract_patches(
        x.astype(jnp.bfloat16), KH, KW, stride, padding, dilation
    )
    M, K = patches.shape

    # ---- Ternary quantization hoisted out of the kernel (runs once), -------
    # ---- pre-transposed to (K, OCp), OCp lane-dense (multiple of 128). -----
    pos = pos_scale.reshape(()).astype(jnp.float32)
    neg = neg_scale.reshape(()).astype(jnp.float32)
    w2d = weight.reshape(OC, C * KH * KW).astype(jnp.float32)
    # Same semantics as the PyTorch module: pos*(w>0) + neg*(w<0) (additive neg).
    tw = jnp.where(w2d > 0, pos, jnp.float32(0.0)) + jnp.where(
        w2d < 0, neg, jnp.float32(0.0)
    )                                                               # (OC, K)
    OCp = _round_up(OC, 128)
    twT = jnp.pad(tw.T, ((0, 0), (0, OCp - OC))).astype(jnp.bfloat16)   # (K, OCp)
    bias2d = jnp.pad(bias.astype(jnp.float32), (0, OCp - OC)).reshape(1, OCp)

    # ---- Tiling policy (VMEM-budget-derived, v7x-safe). --------------------
    w_bytes = K * OCp * 2
    weight_resident = (2 * w_bytes) <= (_VMEM_BUDGET // 4)
    if weight_resident:
        tn = OCp                       # whole weight VMEM-resident; no per-i re-reads
    else:
        tn = 256 if OCp % 256 == 0 else 128

    # Budget: 2 patch buffers (bf16) + 2 out buffers (f32) per row, plus the
    # (double-buffer-counted) weight and bias buffers.
    bytes_per_row = 2 * K * 2 + 2 * tn * 4
    fixed_bytes = 2 * K * tn * 2 + 2 * tn * 4
    tm = (_VMEM_BUDGET - fixed_bytes) // max(bytes_per_row, 1)
    tm = max(8, min(tm_max, (tm // 8) * 8))

    # Balance M tiles so ragged-edge waste stays bounded, and guarantee >=2
    # grid steps along a parallel axis (keeps both v7x TensorCores busy).
    num_m = pl.cdiv(M, tm)
    num_n = OCp // tn
    if num_m * num_n < 2:
        num_m = min(2, pl.cdiv(M, 8))
    tm = min(tm, _round_up(pl.cdiv(M, num_m), 8))
    num_m = pl.cdiv(M, tm)
    grid = (num_m, num_n)

    weight_read_bytes = (K * OCp * 2) if weight_resident else (num_m * K * OCp * 2)
    cost = pl.CostEstimate(
        flops=2 * (num_m * tm) * K * OCp,
        transcendentals=0,
        bytes_accessed=M * K * 2 + weight_read_bytes + OCp * 4 + M * OCp * 4,
    )

    out = pl.pallas_call(
        ttq_conv_kernel,
        out_shape=jax.ShapeDtypeStruct((M, OCp), jnp.float32),
        grid_spec=pltpu.PrefetchScalarGridSpec(
            num_scalar_prefetch=0,
            grid=grid,
            in_specs=[
                pl.BlockSpec((tm, K), lambda i, j: (i, 0)),   # patches tile (bf16)
                pl.BlockSpec((K, tn), lambda i, j: (0, j)),   # ternary weight (resident when tn==OCp)
                pl.BlockSpec((1, tn), lambda i, j: (0, j)),   # bias tile
            ],
            out_specs=pl.BlockSpec((tm, tn), lambda i, j: (i, j)),
        ),
        compiler_params=pltpu.CompilerParams(
            dimension_semantics=("parallel", "parallel"),
            vmem_limit_bytes=_VMEM_BUDGET,
        ),
        cost_estimate=cost,
    )(patches, twT, bias2d)

    # Slice off the OC padding, back to NCHW (module returns f32 NCHW).
    out = out[:, :OC].reshape(N, OH, OW, OC).transpose(0, 3, 1, 2)
    return out


# ---------------------------------------------------------------------------
# Deterministic parameter init (mirrors TTQConv2d.reset_parameters)
# ---------------------------------------------------------------------------
def init_params(key, in_channels, out_channels, kernel_size):
    kh, kw = kernel_size
    kw_key, kb_key = jax.random.split(key)
    fan_in = in_channels * kh * kw
    # kaiming_uniform_(a=sqrt(5))  ->  U(-1/sqrt(fan_in), 1/sqrt(fan_in))
    w_bound = 1.0 / math.sqrt(fan_in)
    weight = jax.random.uniform(
        kw_key, (out_channels, in_channels, kh, kw),
        minval=-w_bound, maxval=w_bound, dtype=jnp.float32,
    )
    pos_scale = jnp.ones((1,), jnp.float32)
    neg_scale = jnp.ones((1,), jnp.float32)
    b_bound = 1.0 / math.sqrt(fan_in)
    bias = jax.random.uniform(
        kb_key, (out_channels,), minval=-b_bound, maxval=b_bound, dtype=jnp.float32
    )
    return weight, pos_scale, neg_scale, bias


if __name__ == "__main__":
    key = jax.random.PRNGKey(0)
    x_key, p_key = jax.random.split(key)

    # Small shapes consistent with the module: NCHW input, 3x3 conv, pad=1.
    N, C, H, W = 2, 4, 16, 16
    OC, KH, KW = 8, 3, 3
    stride, padding, dilation = 1, 1, 1

    x = jax.random.normal(x_key, (N, C, H, W), dtype=jnp.float32)
    weight, pos_scale, neg_scale, bias = init_params(p_key, C, OC, (KH, KW))

    conv = jax.jit(functools.partial(
        ttq_conv2d, stride=stride, padding=padding, dilation=dilation))
    out = conv(x, weight, pos_scale, neg_scale, bias)
    out = jax.block_until_ready(out)

    # Pure-JAX reference (same ternary quantization + conv2d).  The kernel
    # rounds activations to bf16 before the MXU, so the reference uses the
    # same bf16-rounded activations; ternary weights (0 / ±1 here) are exact.
    x_bf = x.astype(jnp.bfloat16).astype(jnp.float32)
    tw = pos_scale * (weight > 0).astype(jnp.float32) + \
         neg_scale * (weight < 0).astype(jnp.float32)
    ref = jax.lax.conv_general_dilated(
        x_bf, tw, window_strides=(stride, stride),
        padding=[(padding, padding), (padding, padding)],
        rhs_dilation=(dilation, dilation),
        dimension_numbers=("NCHW", "OIHW", "NCHW"),
        precision=jax.lax.Precision.HIGHEST,
    ) + bias[None, :, None, None]
    assert out.shape == (N, OC, H, W)
    assert jnp.allclose(out, ref, atol=1e-3, rtol=1e-3), "mismatch vs reference"

    print("KERNEL_OK")
</pallas_src>

<mosaic_0001>
module attributes {stable_mosaic.version = 11 : i64} {
  func.func @ttq_conv_kernel(%arg0: i32, %arg1: i32, %arg2: memref<256x36xbf16, #tpu.memory_space<vmem>>, %arg3: memref<36x128xbf16, #tpu.memory_space<vmem>>, %arg4: memref<1x128xf32, #tpu.memory_space<vmem>>, %arg5: memref<256x128xf32, #tpu.memory_space<vmem>>) attributes {dimension_semantics = [#tpu.dimension_semantics<parallel>, #tpu.dimension_semantics<parallel>], iteration_bounds = array<i64: 2, 1>, scalar_prefetch = 0 : i64, scratch_operands = 0 : i64, tpu.core_type = #tpu.core_type<tc>, window_params = [{transform_indices = @transform_0, window_bounds = array<i64: 256, 36>}, {transform_indices = @transform_1, window_bounds = array<i64: 36, 128>}, {transform_indices = @transform_2, window_bounds = array<i64: 1, 128>}, {transform_indices = @transform_3, window_bounds = array<i64: 256, 128>}]} {
    %c0 = arith.constant 0 : index
    %c0_0 = arith.constant 0 : index
    %0 = vector.load %arg2[%c0, %c0_0] : memref<256x36xbf16, #tpu.memory_space<vmem>>, vector<256x36xbf16>
    %c0_1 = arith.constant 0 : index
    %c0_2 = arith.constant 0 : index
    %1 = vector.load %arg3[%c0_1, %c0_2] : memref<36x128xbf16, #tpu.memory_space<vmem>>, vector<36x128xbf16>
    %cst = arith.constant dense<0.000000e+00> : vector<256x128xf32>
    %2 = tpu.matmul %0, %1, %cst {dimension_numbers = #tpu.dot_dimension_numbers<[1], [0], [0], [1], [0, 0, 1, 1], [], []>} : vector<256x36xbf16>, vector<36x128xbf16>, vector<256x128xf32> -> vector<256x128xf32>
    %c0_3 = arith.constant 0 : index
    %c0_4 = arith.constant 0 : index
    %3 = vector.load %arg4[%c0_3, %c0_4] : memref<1x128xf32, #tpu.memory_space<vmem>>, vector<1x128xf32>
    %4 = vector.broadcast %3 : vector<1x128xf32> to vector<256x128xf32>
    %5 = arith.addf %2, %4 : vector<256x128xf32>
    %c0_5 = arith.constant 0 : index
    %c0_6 = arith.constant 0 : index
    %6 = vector.load %arg5[%c0_5, %c0_6] : memref<256x128xf32, #tpu.memory_space<vmem>>, vector<256x128xf32>
    tpu.vector_store %arg5[%c0_5, %c0_6], %5 {strides = array<i32>} : memref<256x128xf32, #tpu.memory_space<vmem>>, vector<256x128xf32>,
    return
  }
  func.func @transform_0(%arg0: i32, %arg1: i32) -> (i32, i32) {
    %c0_i32 = arith.constant 0 : i32
    %c0_i32_0 = arith.constant 0 : i32
    return %arg0, %c0_i32 : i32, i32
  }
  func.func @transform_1(%arg0: i32, %arg1: i32) -> (i32, i32) {
    %c0_i32 = arith.constant 0 : i32
    %c0_i32_0 = arith.constant 0 : i32
    return %c0_i32, %arg1 : i32, i32
  }
  func.func @transform_2(%arg0: i32, %arg1: i32) -> (i32, i32) {
    %c0_i32 = arith.constant 0 : i32
    %c0_i32_0 = arith.constant 0 : i32
    return %c0_i32, %arg1 : i32, i32
  }
  func.func @transform_3(%arg0: i32, %arg1: i32) -> (i32, i32) {
    %c0_i32 = arith.constant 0 : i32
    return %arg0, %arg1 : i32, i32
  }
}

</mosaic_0001>

<llo_original>
// kernel: ttq_conv2d.1
$region0: #{ttq_conv2d.1}
  #allocation0 [shape = 'u32[]', space=smem, size = 0x4, offset = 0x4, fixed_abs, tag = 'smem constant byte address 0x4 - core index']
  #allocation1 [shape = 'u32[144,128]{1,0:T(1,128)}', space=vmem, size = 0x12000, scoped, tag = 'internal scratch']
  %s0 = inlined_call_operand.vmem [shape: bf16[512,36], index: 0, kind: input, shape index: {}]
  %s1 = inlined_call_operand.vmem [shape: bf16[36,128], index: 1, kind: input, shape index: {}]
  %s2 = inlined_call_operand.vmem [shape: f32[1,128], index: 2, kind: input, shape index: {}]
  %s3 = inlined_call_operand.vmem [shape: f32[512,128], index: 3, kind: output, shape index: {}]
  %s4 = sld [smem:[#allocation0]]
  $region45: #{ttq_conv2d.1} parent=0
    _
  %s6 = ssub.s32 1, %s4
  %s7 = scalar_select 0, %s6, %s4
  loop: start=0, step=1, limit=4
  $region2: #{ttq_conv2d.1} parent=0 // loop_pre_header
    _
  $region3: #{ttq_conv2d.1} parent=0 // loop_header
    %s9 = sphi 0, %s13
    %p10 = scmp.ge.s32.totalorder %s9, 4
    %s16 = sphi 0, %s28
    %s17 = sphi 0, %s24
    %s18 = sphi 0, %s16
    %s19 = sphi 0, %s17
    %s20 = sphi 0, %s18
    %s21 = sphi 0, %s19
    %s31 = sphi 0, %s33
    %s34 = sphi 0, %s31
    %s35 = sphi 0, %s34
    %s51 = sphi 0, %s35
    %s57 = sphi 0, %s59
    %s60 = sphi 0, %s57
    %s61 = sphi 0, %s60
    %s77 = sphi 0, %s61
    %s83 = sphi 0, %s85
    %s86 = sphi 0, %s83
    %s87 = sphi 0, %s86
    %s103 = sphi 0, %s87
    %s111 = sphi 0, %s113
    %s114 = sphi 0, %s111
    %s115 = sphi 0, %s114
    %s131 = sphi 0, %s115
  $region4: #{ttq_conv2d.1} parent=0 // loop_header_branch
    %12 = sbr.rel (%p10) target = $region8
  $region5: #{ttq_conv2d.1} parent=0 // loop_body
    %s14 = ssub.s32 %s9, 1
    %s15 = ssub.s32 %s9, 2
    %s22 = sadd.s32 1, %s17
    %p23 = scmp.ge.s32.totalorder %s22, 1
    %s24 = scalar_select %p23, 0, %s22
    %s25 = sadd.s32 1, %s16
    %s26 = scalar_select %p23, %s25, %s16
    %p27 = scmp.ge.s32.totalorder %s26, 2
    %s28 = scalar_select %p27, 0, %s26
    %s29 = ssub.s32 %s16, %s28
    %p30 = scmp.eq.s32.totalorder %s29, 0
    %s32 = sadd.s32 %s31, 1
    %s33 = scalar_select %p30, %s31, %s32
    %p36 = pneg %p30
    %p37 = scmp.eq.s32.totalorder %s9, 1
    %p38 = por %p36, %p37
    %p39 = scmp.ne.s32.totalorder %s31, %s34
    %p40 = scmp.eq.s32.totalorder %s9, 0
    %p41 = por %p39, %p40
    %p42 = scmp.ne.s32.totalorder %s31, %s34
    %p43 = scmp.eq.s32.totalorder %s14, 1
    %p44 = por %p42, %p43
    %p45 = scmp.ne.s32.totalorder %s34, %s35
    %p46 = scmp.eq.s32.totalorder %s14, 0
    %p47 = por %p45, %p46
    %p48 = scmp.ne.s32.totalorder %s34, %s35
    %p49 = scmp.eq.s32.totalorder %s15, 1
    %p50 = por %p48, %p49
    %p52 = scmp.ne.s32.totalorder %s35, %s51
    %p53 = scmp.eq.s32.totalorder %s15, 0
    %p54 = por %p52, %p53
    %s55 = ssub.s32 %s17, %s24
    %p56 = scmp.eq.s32.totalorder %s55, 0
    %s58 = sadd.s32 %s57, 1
    %s59 = scalar_select %p56, %s57, %s58
    %p62 = pneg %p56
    %p63 = scmp.eq.s32.totalorder %s9, 1
    %p64 = por %p62, %p63
    %p65 = scmp.ne.s32.totalorder %s57, %s60
    %p66 = scmp.eq.s32.totalorder %s9, 0
    %p67 = por %p65, %p66
    %p68 = scmp.ne.s32.totalorder %s57, %s60
    %p69 = scmp.eq.s32.totalorder %s14, 1
    %p70 = por %p68, %p69
    %p71 = scmp.ne.s32.totalorder %s60, %s61
    %p72 = scmp.eq.s32.totalorder %s14, 0
    %p73 = por %p71, %p72
    %p74 = scmp.ne.s32.totalorder %s60, %s61
    %p75 = scmp.eq.s32.totalorder %s15, 1
    %p76 = por %p74, %p75
    %p78 = scmp.ne.s32.totalorder %s61, %s77
    %p79 = scmp.eq.s32.totalorder %s15, 0
    %p80 = por %p78, %p79
    %s81 = ssub.s32 %s17, %s24
    %p82 = scmp.eq.s32.totalorder %s81, 0
    %s84 = sadd.s32 %s83, 1
    %s85 = scalar_select %p82, %s83, %s84
    %p88 = pneg %p82
    %p89 = scmp.eq.s32.totalorder %s9, 1
    %p90 = por %p88, %p89
    %p91 = scmp.ne.s32.totalorder %s83, %s86
    %p92 = scmp.eq.s32.totalorder %s9, 0
    %p93 = por %p91, %p92
    %p94 = scmp.ne.s32.totalorder %s83, %s86
    %p95 = scmp.eq.s32.totalorder %s14, 1
    %p96 = por %p94, %p95
    %p97 = scmp.ne.s32.totalorder %s86, %s87
    %p98 = scmp.eq.s32.totalorder %s14, 0
    %p99 = por %p97, %p98
    %p100 = scmp.ne.s32.totalorder %s86, %s87
    %p101 = scmp.eq.s32.totalorder %s15, 1
    %p102 = por %p100, %p101
    %p104 = scmp.ne.s32.totalorder %s87, %s103
    %p105 = scmp.eq.s32.totalorder %s15, 0
    %p106 = por %p104, %p105
    %s107 = ssub.s32 %s16, %s28
    %s108 = ssub.s32 %s17, %s24
    %s109 = sor.u32 %s107, %s108
    %p110 = scmp.eq.s32.totalorder %s109, 0
    %s112 = sadd.s32 %s111, 1
    %s113 = scalar_select %p110, %s111, %s112
    %p116 = pneg %p110
    %p117 = scmp.eq.s32.totalorder %s9, 1
    %p118 = por %p116, %p117
    %p119 = scmp.ne.s32.totalorder %s111, %s114
    %p120 = scmp.eq.s32.totalorder %s9, 0
    %p121 = por %p119, %p120
    %p122 = scmp.ne.s32.totalorder %s111, %s114
    %p123 = scmp.eq.s32.totalorder %s14, 1
    %p124 = por %p122, %p123
    %p125 = scmp.ne.s32.totalorder %s114, %s115
    %p126 = scmp.eq.s32.totalorder %s14, 0
    %p127 = por %p125, %p126
    %p128 = scmp.ne.s32.totalorder %s114, %s115
    %p129 = scmp.eq.s32.totalorder %s15, 1
    %p130 = por %p128, %p129
    %p132 = scmp.ne.s32.totalorder %s115, %s131
    %p133 = scmp.eq.s32.totalorder %s15, 0
    %p134 = por %p132, %p133
    %p135 = scmp.le.s32.totalorder 1, %s9
    %p136 = scmp.lt.s32.totalorder %s9, 3
    %p137 = pnand %p135, %p136
    %p138 = pneg %p137
    // Predicated region
    $region9: #{ttq_conv2d.1} parent=5 // pred_check
      _
    $region10: #{ttq_conv2d.1} parent=5 // pred_check_branch
      %140 = sbr.rel (%p137) target = $region12
    $region11: #{ttq_conv2d.1} parent=5 // pred_region
      %s141 = ssub.s32 %s9, 1
      // Predicated region
      $region13: #{ttq_conv2d.1} parent=11 // pred_check
        %p142 = pneg %p73
      $region14: #{ttq_conv2d.1} parent=11 // pred_check_branch
        %144 = sbr.rel (%p142) target = $region16
      $region15: #{ttq_conv2d.1} parent=11 // pred_region
        %p145 = scmp.lt.s32.totalorder %s19, 0
        %s146 = scalar_select %p145, %s19, 0
        %s147 = smul.addr %s146, 4
        %s148 = scalar_lea.vmem %s1, %s147
      $region16: #{ttq_conv2d.1} parent=11 // pred_fallthru
        _
      // Predicated region
      $region17: #{ttq_conv2d.1} parent=11 // pred_check
        %p149 = pneg %p99
      $region18: #{ttq_conv2d.1} parent=11 // pred_check_branch
        %151 = sbr.rel (%p149) target = $region20
      $region19: #{ttq_conv2d.1} parent=11 // pred_region
        %p152 = scmp.lt.s32.totalorder %s19, 0
        %s153 = scalar_select %p152, %s19, 0
        %s154 = scalar_lea.vmem %s2, %s153
      $region20: #{ttq_conv2d.1} parent=11 // pred_fallthru
        _
    $region12: #{ttq_conv2d.1} parent=5 // pred_fallthru
      _
    %p155 = scmp.lt.s32.totalorder %s9, 2
    // Predicated region
    $region21: #{ttq_conv2d.1} parent=5 // pred_check
      %p156 = pneg %p155
    $region22: #{ttq_conv2d.1} parent=5 // pred_check_branch
      %158 = sbr.rel (%p156) target = $region24
    $region23: #{ttq_conv2d.1} parent=5 // pred_region
      // Predicated region
      $region25: #{ttq_conv2d.1} parent=23 // pred_check
        %p159 = pneg %p41
      $region26: #{ttq_conv2d.1} parent=23 // pred_check_branch
        %161 = sbr.rel (%p159) target = $region28
      $region27: #{ttq_conv2d.1} parent=23 // pred_region
        %s162 = smul.u32 32, %s16
        %p163 = scmp.lt.s32.totalorder %s162, 63
        %s164 = scalar_select %p163, %s162, 63
        %s165 = smul.addr %s164, 4
        %s166 = scalar_lea.vmem %s0, %s165
        %s167 = smul.u32 32, %s16
      $region28: #{ttq_conv2d.1} parent=23 // pred_fallthru
        _
    $region24: #{ttq_conv2d.1} parent=5 // pred_fallthru
      _
    %p168 = scmp.le.s32.totalorder 1, %s9
    %p169 = scmp.lt.s32.totalorder %s9, 3
    %p170 = pnand %p168, %p169
    %p171 = pneg %p170
    // Predicated region
    $region29: #{ttq_conv2d.1} parent=5 // pred_check
      _
    $region30: #{ttq_conv2d.1} parent=5 // pred_check_branch
      %173 = sbr.rel (%p170) target = $region32
    $region31: #{ttq_conv2d.1} parent=5 // pred_region
      %s174 = ssub.s32 %s9, 1
      %s175 = smul.u32 32, %s18
      %p176 = scmp.lt.s32.totalorder %s175, 63
      %s177 = scalar_select %p176, %s175, 63
      %s178 = smul.addr %s177, 4
      %s179 = scalar_lea.vmem %s0, %s178
      %p180 = pneg %p47
      %p181 = pneg %p44
      %p182 = scmp.lt.s32.totalorder %s19, 0
      %s183 = scalar_select %p182, %s19, 0
      %s184 = smul.addr %s183, 4
      %s185 = scalar_lea.vmem %s1, %s184
      %p186 = pneg %p73
      %p187 = pneg %p70
      %p188 = scmp.lt.s32.totalorder %s19, 0
      %s189 = scalar_select %p188, %s19, 0
      %s190 = scalar_lea.vmem %s2, %s189
      %p191 = pneg %p99
      %p192 = pneg %p96
      %p193 = pneg %p127
      %p194 = pneg %p124
      %s195 = smul.u32 32, %s18
      %p196 = scmp.lt.s32.totalorder %s195, 63
      %s197 = scalar_select %p196, %s195, 63
      %p198 = scmp.lt.s32.totalorder %s19, 0
      %s199 = scalar_select %p198, %s19, 0
      %s200 = sadd.s32 %s199, %s197
      %s201 = smul.addr %s200, 8
      %s202 = scalar_lea.vmem %s3, %s201
      %s203 = smul.u32 32, %s18
      %p204 = scmp.lt.s32.totalorder %s203, 63
      %s205 = scalar_select %p204, %s203, 63
      %s206 = smul.addr %s205, 4
      %s207 = scalar_lea.vmem %s0, %s206
      %s208 = smul.u32 32, %s18
      %p209 = scmp.lt.s32.totalorder %s19, 0
      %s210 = scalar_select %p209, %s19, 0
      %s211 = smul.addr %s210, 4
      %s212 = scalar_lea.vmem %s1, %s211
      %p213 = scmp.lt.s32.totalorder %s19, 0
      %s214 = scalar_select %p213, %s19, 0
      %s215 = scalar_lea.vmem %s2, %s214
      %s216 = smul.u32 32, %s18
      %p217 = scmp.lt.s32.totalorder %s216, 63
      %s218 = scalar_select %p217, %s216, 63
      %p219 = scmp.lt.s32.totalorder %s19, 0
      %s220 = scalar_select %p219, %s19, 0
      %s221 = sadd.s32 %s220, %s218
      %s222 = smul.addr %s221, 8
      %s223 = scalar_lea.vmem %s3, %s222
      %s224 = smul.u32 32, %s18
      %v226 = vld [vmem:[%s207] sm:$0xf]
      %v227 = vld [vmem:[%s207 + $0x4] sm:$0xf]
      %v228 = vld [vmem:[%s207 + $0x8] sm:$0xf]
      %v229 = vld [vmem:[%s207 + $0xc] sm:$0xf]
      %v230 = vld [vmem:[%s207 + $0x10] sm:$0xf]
      %v231 = vld [vmem:[%s207 + $0x14] sm:$0xf]
      %v232 = vld [vmem:[%s207 + $0x18] sm:$0xf]
      %v233 = vld [vmem:[%s207 + $0x1c] sm:$0xf]
      %v234 = vld [vmem:[%s207 + $0x20] sm:$0xf]
      %v235 = vld [vmem:[%s207 + $0x24] sm:$0xf]
      %v236 = vld [vmem:[%s207 + $0x28] sm:$0xf]
      %v237 = vld [vmem:[%s207 + $0x2c] sm:$0xf]
      %v238 = vld [vmem:[%s207 + $0x30] sm:$0xf]
      %v239 = vld [vmem:[%s207 + $0x34] sm:$0xf]
      %v240 = vld [vmem:[%s207 + $0x38] sm:$0xf]
      %v241 = vld [vmem:[%s207 + $0x3c] sm:$0xf]
      %v242 = vld [vmem:[%s207 + $0x40] sm:$0xf]
      %v243 = vld [vmem:[%s207 + $0x44] sm:$0xf]
      %v244 = vld [vmem:[%s207 + $0x48] sm:$0xf]
      %v245 = vld [vmem:[%s207 + $0x4c] sm:$0xf]
      %v246 = vld [vmem:[%s207 + $0x50] sm:$0xf]
      %v247 = vld [vmem:[%s207 + $0x54] sm:$0xf]
      %v248 = vld [vmem:[%s207 + $0x58] sm:$0xf]
      %v249 = vld [vmem:[%s207 + $0x5c] sm:$0xf]
      %v250 = vld [vmem:[%s207 + $0x60] sm:$0xf]
      %v251 = vld [vmem:[%s207 + $0x64] sm:$0xf]
      %v252 = vld [vmem:[%s207 + $0x68] sm:$0xf]
      %v253 = vld [vmem:[%s207 + $0x6c] sm:$0xf]
      %v254 = vld [vmem:[%s207 + $0x70] sm:$0xf]
      %v255 = vld [vmem:[%s207 + $0x74] sm:$0xf]
      %v256 = vld [vmem:[%s207 + $0x78] sm:$0xf]
      %v257 = vld [vmem:[%s207 + $0x7c] sm:$0xf]
      %v258 = vld [vmem:[%s212] sm:$0xf]
      %v259 = vld [vmem:[%s212 + $0x4] sm:$0xf]
      %v260 = vld [vmem:[%s212 + $0x8] sm:$0xf]
      %v261 = vld [vmem:[%s212 + $0xc] sm:$0xf]
      %v262 = vld [vmem:[%s212 + $0x10] sm:$0x3]
      %v263 = vld [vmem:[%s215] sm:$0x1]
      %v265 = vlaneseq
      %v266 = vshrl.u32 %v265, 7
      %v267 = vsub.s32 0, %v266
      %v268 = vrot.slane %v263, %v267
      %v302 = vunpack.c.l.b16 %v226
      %v303 = vunpack.c.l.b16 %v227
      %v304 = vunpack.c.l.b16 %v228
      %v305 = vunpack.c.l.b16 %v229
      %v306 = vunpack.c.l.b16 %v230
      %v307 = vunpack.c.l.b16 %v231
      %v308 = vunpack.c.l.b16 %v232
      %v309 = vunpack.c.l.b16 %v233
      %v310 = vunpack.c.l.b16 %v234
      %v311 = vunpack.c.l.b16 %v235
      %v312 = vunpack.c.l.b16 %v236
      %v313 = vunpack.c.l.b16 %v237
      %v314 = vunpack.c.l.b16 %v238
      %v315 = vunpack.c.l.b16 %v239
      %v316 = vunpack.c.l.b16 %v240
      %v317 = vunpack.c.l.b16 %v241
      %v318 = vunpack.c.l.b16 %v242
      %v319 = vunpack.c.l.b16 %v243
      %v320 = vunpack.c.l.b16 %v244
      %v321 = vunpack.c.l.b16 %v245
      %v322 = vunpack.c.l.b16 %v246
      %v323 = vunpack.c.l.b16 %v247
      %v324 = vunpack.c.l.b16 %v248
      %v325 = vunpack.c.l.b16 %v249
      %v326 = vunpack.c.l.b16 %v250
      %v327 = vunpack.c.l.b16 %v251
      %v328 = vunpack.c.l.b16 %v252
      %v329 = vunpack.c.l.b16 %v253
      %v330 = vunpack.c.l.b16 %v254
      %v331 = vunpack.c.l.b16 %v255
      %v332 = vunpack.c.l.b16 %v256
      %v333 = vunpack.c.l.b16 %v257
      %v334 = vpack.c.b16 %v303, %v302
      %v335 = vpack.c.b16 %v305, %v304
      %v336 = vpack.c.b16 %v307, %v306
      %v337 = vpack.c.b16 %v309, %v308
      %v338 = vpack.c.b16 %v311, %v310
      %v339 = vpack.c.b16 %v313, %v312
      %v340 = vpack.c.b16 %v315, %v314
      %v341 = vpack.c.b16 %v317, %v316
      %v342 = vpack.c.b16 %v319, %v318
      %v343 = vpack.c.b16 %v321, %v320
      %v344 = vpack.c.b16 %v323, %v322
      %v345 = vpack.c.b16 %v325, %v324
      %v346 = vpack.c.b16 %v327, %v326
      %v347 = vpack.c.b16 %v329, %v328
      %v348 = vpack.c.b16 %v331, %v330
      %v349 = vpack.c.b16 %v333, %v332
      %v355 = vunpack.c.l.b16 %v258
      %v356 = vunpack.c.l.b16 %v259
      %v357 = vunpack.c.l.b16 %v260
      %v358 = vunpack.c.l.b16 %v261
      %v359 = vunpack.c.l.b16 %v262
      %v360 = vpack.c.b16 %v356, %v355
      %v361 = vpack.c.b16 %v358, %v357
      %v362 = vpack.c.b16 %v359, %v359
      %vm365 = vcmask 293888
      %v367 = vsel %vm365, %v334, 0
      %v370 = vsel %vm365, %v335, 0
      %v373 = vsel %vm365, %v336, 0
      %v376 = vsel %vm365, %v337, 0
      %v379 = vsel %vm365, %v338, 0
      %v382 = vsel %vm365, %v339, 0
      %v385 = vsel %vm365, %v340, 0
      %v388 = vsel %vm365, %v341, 0
      %v391 = vsel %vm365, %v342, 0
      %v394 = vsel %vm365, %v343, 0
      %v397 = vsel %vm365, %v344, 0
      %v400 = vsel %vm365, %v345, 0
      %v403 = vsel %vm365, %v346, 0
      %v406 = vsel %vm365, %v347, 0
      %v409 = vsel %vm365, %v348, 0
      %v412 = vsel %vm365, %v349, 0
      %vm414 = vcmask 1041408
      %v416 = vsel %vm414, %v362, 0
      %418 = vmatprep.subr.bf16.mxu0 0
      %419 = vmatpush1.bf16.msra.mxu0 %v360
      %420 = vmatprep.subr.bf16.mxu0 0
      %421 = vmatpush1.bf16.msra.mxu0 %v361
      %422 = vmatprep.subr.bf16.mxu0 0
      %423 = vmatpush1.bf16.msra.mxu0 %v416
      %424 = vmatprep.subr.bf16.mxu0 0
      %425 = vmatpush1.bf16.msra.mxu0 0
      %426 = vmatprep.subr.bf16.mxu0 0
      %427 = vmatpush1.bf16.msra.mxu0 0
      %428 = vmatprep.subr.bf16.mxu0 0
      %429 = vmatpush1.bf16.msra.mxu0 0
      %430 = vmatprep.subr.bf16.mxu0 0
      %431 = vmatpush1.bf16.msra.mxu0 0
      %432 = vmatprep.subr.bf16.mxu0 0
      %433 = vmatpush1.bf16.msra.mxu0 0
      %434 = vmatprep.subr.bf16.mxu0 0
      %435 = vmatpush1.bf16.msra.mxu0 0
      %436 = vmatprep.subr.bf16.mxu0 0
      %437 = vmatpush1.bf16.msra.mxu0 0
      %438 = vmatprep.subr.bf16.mxu0 0
      %439 = vmatpush1.bf16.msra.mxu0 0
      %440 = vmatprep.subr.bf16.mxu0 0
      %441 = vmatpush1.bf16.msra.mxu0 0
      %442 = vmatprep.subr.bf16.mxu0 0
      %443 = vmatpush1.bf16.msra.mxu0 0
      %444 = vmatprep.subr.bf16.mxu0 0
      %445 = vmatpush1.bf16.msra.mxu0 0
      %446 = vmatprep.subr.bf16.mxu0 0
      %447 = vmatpush1.bf16.msra.mxu0 0
      %448 = vmatprep.subr.bf16.mxu0 0
      %449 = vmatpush1.bf16.msra.mxu0 0
      %450 = vmatprep.mubr.bf16.mxu0 0
      %451 = vmatmul.mubr.bf16.gmra.mrb[0].mxu0 %v367
      %v452 = vpop.f32.mrb[0].mxu0
      %v453 = vadd.f32 %v268, %v452
      %v454 = vpop.f32.mrb[0].mxu0
      %v455 = vpop.f32.mrb[0].mxu0
      %v456 = vadd.f32 %v268, %v455
      %v457 = vpop.f32.mrb[0].mxu0
      %458 = vmatprep.mubr.bf16.mxu0 0
      %459 = vmatmul.mubr.bf16.gmra.mrb[0].mxu0 %v370
      %v460 = vpop.f32.mrb[0].mxu0
      %v461 = vadd.f32 %v268, %v460
      %v462 = vpop.f32.mrb[0].mxu0
      %v463 = vpop.f32.mrb[0].mxu0
      %v464 = vadd.f32 %v268, %v463
      %v465 = vpop.f32.mrb[0].mxu0
      %466 = vmatprep.mubr.bf16.mxu0 0
      %467 = vmatmul.mubr.bf16.gmra.mrb[0].mxu0 %v373
      %v468 = vpop.f32.mrb[0].mxu0
      %v469 = vadd.f32 %v268, %v468
      %v470 = vpop.f32.mrb[0].mxu0
      %v471 = vpop.f32.mrb[0].mxu0
      %v472 = vadd.f32 %v268, %v471
      %v473 = vpop.f32.mrb[0].mxu0
      %474 = vmatprep.mubr.bf16.mxu0 0
      %475 = vmatmul.mubr.bf16.gmra.mrb[0].mxu0 %v376
      %v476 = vpop.f32.mrb[0].mxu0
      %v477 = vadd.f32 %v268, %v476
      %v478 = vpop.f32.mrb[0].mxu0
      %v479 = vpop.f32.mrb[0].mxu0
      %v480 = vadd.f32 %v268, %v479
      %v481 = vpop.f32.mrb[0].mxu0
      %482 = vmatprep.mubr.bf16.mxu0 0
      %483 = vmatmul.mubr.bf16.gmra.mrb[0].mxu0 %v379
      %v484 = vpop.f32.mrb[0].mxu0
      %v485 = vadd.f32 %v268, %v484
      %v486 = vpop.f32.mrb[0].mxu0
      %v487 = vpop.f32.mrb[0].mxu0
      %v488 = vadd.f32 %v268, %v487
      %v489 = vpop.f32.mrb[0].mxu0
      %490 = vmatprep.mubr.bf16.mxu0 0
      %491 = vmatmul.mubr.bf16.gmra.mrb[0].mxu0 %v382
      %v492 = vpop.f32.mrb[0].mxu0
      %v493 = vadd.f32 %v268, %v492
      %v494 = vpop.f32.mrb[0].mxu0
      %v495 = vpop.f32.mrb[0].mxu0
      %v496 = vadd.f32 %v268, %v495
      %v497 = vpop.f32.mrb[0].mxu0
      %498 = vmatprep.mubr.bf16.mxu0 0
      %499 = vmatmul.mubr.bf16.gmra.mrb[0].mxu0 %v385
      %v500 = vpop.f32.mrb[0].mxu0
      %v501 = vadd.f32 %v268, %v500
      %v502 = vpop.f32.mrb[0].mxu0
      %v503 = vpop.f32.mrb[0].mxu0
      %v504 = vadd.f32 %v268, %v503
      %v505 = vpop.f32.mrb[0].mxu0
      %506 = vmatprep.mubr.bf16.mxu0 0
      %507 = vmatmul.mubr.bf16.gmra.mrb[0].mxu0 %v388
      %v508 = vpop.f32.mrb[0].mxu0
      %v509 = vadd.f32 %v268, %v508
      %v510 = vpop.f32.mrb[0].mxu0
      %v511 = vpop.f32.mrb[0].mxu0
      %v512 = vadd.f32 %v268, %v511
      %v513 = vpop.f32.mrb[0].mxu0
      %514 = vmatprep.mubr.bf16.mxu0 0
      %515 = vmatmul.mubr.bf16.gmra.mrb[0].mxu0 %v391
      %v516 = vpop.f32.mrb[0].mxu0
      %v517 = vadd.f32 %v268, %v516
      %v518 = vpop.f32.mrb[0].mxu0
      %v519 = vpop.f32.mrb[0].mxu0
      %v520 = vadd.f32 %v268, %v519
      %v521 = vpop.f32.mrb[0].mxu0
      %522 = vmatprep.mubr.bf16.mxu0 0
      %523 = vmatmul.mubr.bf16.gmra.mrb[0].mxu0 %v394
      %v524 = vpop.f32.mrb[0].mxu0
      %v525 = vadd.f32 %v268, %v524
      %v526 = vpop.f32.mrb[0].mxu0
      %v527 = vpop.f32.mrb[0].mxu0
      %v528 = vadd.f32 %v268, %v527
      %v529 = vpop.f32.mrb[0].mxu0
      %530 = vmatprep.mubr.bf16.mxu0 0
      %531 = vmatmul.mubr.bf16.gmra.mrb[0].mxu0 %v397
      %v532 = vpop.f32.mrb[0].mxu0
      %v533 = vadd.f32 %v268, %v532
      %v534 = vpop.f32.mrb[0].mxu0
      %v535 = vpop.f32.mrb[0].mxu0
      %v536 = vadd.f32 %v268, %v535
      %v537 = vpop.f32.mrb[0].mxu0
      %538 = vmatprep.mubr.bf16.mxu0 0
      %539 = vmatmul.mubr.bf16.gmra.mrb[0].mxu0 %v400
      %v540 = vpop.f32.mrb[0].mxu0
      %v541 = vadd.f32 %v268, %v540
      %v542 = vpop.f32.mrb[0].mxu0
      %v543 = vpop.f32.mrb[0].mxu0
      %v544 = vadd.f32 %v268, %v543
      %v545 = vpop.f32.mrb[0].mxu0
      %546 = vmatprep.mubr.bf16.mxu0 0
      %547 = vmatmul.mubr.bf16.gmra.mrb[0].mxu0 %v403
      %v548 = vpop.f32.mrb[0].mxu0
      %v549 = vadd.f32 %v268, %v548
      %v550 = vpop.f32.mrb[0].mxu0
      %v551 = vpop.f32.mrb[0].mxu0
      %v552 = vadd.f32 %v268, %v551
      %v553 = vpop.f32.mrb[0].mxu0
      %554 = vmatprep.mubr.bf16.mxu0 0
      %555 = vmatmul.mubr.bf16.gmra.mrb[0].mxu0 %v406
      %v556 = vpop.f32.mrb[0].mxu0
      %v557 = vadd.f32 %v268, %v556
      %v558 = vpop.f32.mrb[0].mxu0
      %v559 = vpop.f32.mrb[0].mxu0
      %v560 = vadd.f32 %v268, %v559
      %v561 = vpop.f32.mrb[0].mxu0
      %562 = vmatprep.mubr.bf16.mxu0 0
      %563 = vmatmul.mubr.bf16.gmra.mrb[0].mxu0 %v409
      %v564 = vpop.f32.mrb[0].mxu0
      %v565 = vadd.f32 %v268, %v564
      %v566 = vpop.f32.mrb[0].mxu0
      %v567 = vpop.f32.mrb[0].mxu0
      %v568 = vadd.f32 %v268, %v567
      %v569 = vpop.f32.mrb[0].mxu0
      %570 = vmatprep.mubr.bf16.mxu0 0
      %571 = vmatmul.mubr.bf16.gmra.mrb[0].mxu0 %v412
      %v572 = vpop.f32.mrb[0].mxu0
      %v573 = vadd.f32 %v268, %v572
      %v574 = vpop.f32.mrb[0].mxu0
      %v575 = vpop.f32.mrb[0].mxu0
      %v576 = vadd.f32 %v268, %v575
      %v577 = vpop.f32.mrb[0].mxu0
      %578 = vdwg.mxu0
      %579 = vst [vmem:[%s223] sm:$0xff] %v453
      %580 = vst [vmem:[%s223 + $0x8] sm:$0xff] %v456
      %581 = vst [vmem:[%s223 + $0x10] sm:$0xff] %v461
      %582 = vst [vmem:[%s223 + $0x18] sm:$0xff] %v464
      %583 = vst [vmem:[%s223 + $0x20] sm:$0xff] %v469
      %584 = vst [vmem:[%s223 + $0x28] sm:$0xff] %v472
      %585 = vst [vmem:[%s223 + $0x30] sm:$0xff] %v477
      %586 = vst [vmem:[%s223 + $0x38] sm:$0xff] %v480
      %587 = vst [vmem:[%s223 + $0x40] sm:$0xff] %v485
      %588 = vst [vmem:[%s223 + $0x48] sm:$0xff] %v488
      %589 = vst [vmem:[%s223 + $0x50] sm:$0xff] %v493
      %590 = vst [vmem:[%s223 + $0x58] sm:$0xff] %v496
      %591 = vst [vmem:[%s223 + $0x60] sm:$0xff] %v501
      %592 = vst [vmem:[%s223 + $0x68] sm:$0xff] %v504
      %593 = vst [vmem:[%s223 + $0x70] sm:$0xff] %v509
      %594 = vst [vmem:[%s223 + $0x78] sm:$0xff] %v512
      %595 = vst [vmem:[%s223 + $0x80] sm:$0xff] %v517
      %596 = vst [vmem:[%s223 + $0x88] sm:$0xff] %v520
      %597 = vst [vmem:[%s223 + $0x90] sm:$0xff] %v525
      %598 = vst [vmem:[%s223 + $0x98] sm:$0xff] %v528
      %599 = vst [vmem:[%s223 + $0xa0] sm:$0xff] %v533
      %600 = vst [vmem:[%s223 + $0xa8] sm:$0xff] %v536
      %601 = vst [vmem:[%s223 + $0xb0] sm:$0xff] %v541
      %602 = vst [vmem:[%s223 + $0xb8] sm:$0xff] %v544
      %603 = vst [vmem:[%s223 + $0xc0] sm:$0xff] %v549
      %604 = vst [vmem:[%s223 + $0xc8] sm:$0xff] %v552
      %605 = vst [vmem:[%s223 + $0xd0] sm:$0xff] %v557
      %606 = vst [vmem:[%s223 + $0xd8] sm:$0xff] %v560
      %607 = vst [vmem:[%s223 + $0xe0] sm:$0xff] %v565
      %608 = vst [vmem:[%s223 + $0xe8] sm:$0xff] %v568
      %609 = vst [vmem:[%s223 + $0xf0] sm:$0xff] %v573
      %610 = vst [vmem:[%s223 + $0xf8] sm:$0xff] %v576
      %s611 = smul.u32 32, %s18
      %p612 = scmp.lt.s32.totalorder %s611, 63
      %s613 = scalar_select %p612, %s611, 63
      %p614 = scmp.lt.s32.totalorder %s19, 0
      %s615 = scalar_select %p614, %s19, 0
      %s616 = sadd.s32 %s615, %s613
      %s617 = smul.addr %s616, 8
      %s618 = scalar_lea.vmem %s3, %s617
      // Predicated region
      $region33: #{ttq_conv2d.1} parent=31 // pred_check
        %p619 = pneg %p124
      $region34: #{ttq_conv2d.1} parent=31 // pred_check_branch
        %621 = sbr.rel (%p619) target = $region36
      $region35: #{ttq_conv2d.1} parent=31 // pred_region
        %s622 = smul.u32 32, %s18
      $region36: #{ttq_conv2d.1} parent=31 // pred_fallthru
        _
    $region32: #{ttq_conv2d.1} parent=5 // pred_fallthru
      _
    %p623 = scmp.le.s32.totalorder 2, %s9
    // Predicated region
    $region37: #{ttq_conv2d.1} parent=5 // pred_check
      %p624 = pneg %p623
    $region38: #{ttq_conv2d.1} parent=5 // pred_check_branch
      %626 = sbr.rel (%p624) target = $region40
    $region39: #{ttq_conv2d.1} parent=5 // pred_region
      %s627 = ssub.s32 %s9, 2
      // Predicated region
      $region41: #{ttq_conv2d.1} parent=39 // pred_check
        %p628 = pneg %p130
      $region42: #{ttq_conv2d.1} parent=39 // pred_check_branch
        %630 = sbr.rel (%p628) target = $region44
      $region43: #{ttq_conv2d.1} parent=39 // pred_region
        %s631 = smul.u32 32, %s20
        %p632 = scmp.lt.s32.totalorder %s631, 63
        %s633 = scalar_select %p632, %s631, 63
        %p634 = scmp.lt.s32.totalorder %s21, 0
        %s635 = scalar_select %p634, %s21, 0
        %s636 = sadd.s32 %s635, %s633
        %s637 = smul.addr %s636, 8
        %s638 = scalar_lea.vmem %s3, %s637
      $region44: #{ttq_conv2d.1} parent=39 // pred_fallthru
        _
    $region40: #{ttq_conv2d.1} parent=5 // pred_fallthru
      _
  $region6: #{ttq_conv2d.1} parent=0 // loop_footer
    %s13 = sadd.s32 1, %s9
  $region7: #{ttq_conv2d.1} parent=0 // loop_footer_branch
    %8 = sbr.rel target = $region3
  $region8: #{ttq_conv2d.1} parent=0 // loop_exit
    _

</llo_original>
